<compile_context>
chip_gen: v5e
topology: v5e:2x2
jax: 0.10.0
libtpu: 0.0.40
codegen_flags: <defaults>
</compile_context>

<pallas_src>
import functools

import jax
import jax.numpy as jnp
from jax import lax
from jax.experimental import pallas as pl
from jax.experimental.pallas import tpu as pltpu


def _round_up(x, m):
    return (x + m - 1) // m * m


def _nbytes(shape, dtype):
    n = 1
    for s in shape:
        n *= int(s)
    return n * jnp.dtype(dtype).itemsize


def _pad2d(x, rows, cols, dtype, fill=0.0):
    """Pad a 2-D array to (rows, cols); the copy is skipped when already aligned."""
    r, c = x.shape
    x = x.astype(dtype)
    if r == rows and c == cols:
        return x
    if fill == 0.0:
        out = jnp.zeros((rows, cols), dtype)
    else:
        out = jnp.full((rows, cols), fill, dtype)
    return out.at[:r, :c].set(x)


# ---------------------------------------------------------------------------
# kernel bodies
# ---------------------------------------------------------------------------
def _edge_messages(src_ref, edge_ref, sid_ref, w_ref, *, mp_op, distributes,
                   use_deg_lane, cdt, fo_pad):
    """Per-edge messages [TE, Fo_pad] (f32) for the current edge tile."""
    te = edge_ref.shape[0]
    ns_pad = src_ref.shape[0]

    # gather source rows with a one-hot MXU contraction (edges on sublanes)
    sid = sid_ref[...]                                            # [TE, 1] (-1 = pad)
    src_iota = lax.broadcasted_iota(jnp.int32, (te, ns_pad), 1)
    onehot_src = (sid == src_iota).astype(cdt)                    # [TE, Ns_pad]
    gathered = jnp.dot(onehot_src, src_ref[...].astype(cdt),
                       preferred_element_type=jnp.float32)

    eft = edge_ref[...]
    if distributes:
        # concat/add/sub: src side is already projected (src_ref == src_proj),
        # edge side needs one matmul with the (sign-folded) edge weights.
        msg = gathered + jnp.dot(eft.astype(cdt), w_ref[...].astype(cdt),
                                 preferred_element_type=jnp.float32)
    else:
        combined = gathered * eft if mp_op == 'mul' else gathered / eft
        msg = jnp.dot(combined.astype(cdt), w_ref[...].astype(cdt),
                      preferred_element_type=jnp.float32)

    if use_deg_lane:
        # fold the in-degree count into the scatter matmul via a reserved
        # padding lane (only done when out_feat is not 128-aligned).
        col = lax.broadcasted_iota(jnp.int32, (te, fo_pad), 1)
        msg = jnp.where(col == fo_pad - 1, 1.0, msg)
    return msg


def _scatter_accumulate(msg, did_row, d_step, acc_ref, deg_ref, cdt):
    tnd = acc_ref.shape[0]
    te = msg.shape[0]
    if isinstance(d_step, int) and d_step == 0:
        did_local = did_row                                       # [1, TE]
    else:
        did_local = did_row - d_step * tnd                        # cheap 2-vreg sub
    dst_iota = lax.broadcasted_iota(jnp.int32, (tnd, te), 0)
    onehot_dst = (did_local == dst_iota).astype(jnp.float32)      # [TND, TE]
    acc_ref[...] += jnp.dot(onehot_dst.astype(cdt), msg.astype(cdt),
                            preferred_element_type=jnp.float32)
    if deg_ref is not None:
        deg_ref[...] += jnp.sum(onehot_dst, axis=1, keepdims=True)


def _finalize(out_ref, acc_ref, deg_ref, bias_ref, fo_pad):
    acc = acc_ref[...]
    deg = acc[:, fo_pad - 1:fo_pad] if deg_ref is None else deg_ref[...]
    norm = jnp.where(deg > 0, lax.rsqrt(deg), 0.0)                # no inf/NaN
    out_ref[...] = acc * norm + bias_ref[...]


def _fused_kernel(*refs, mp_op, distributes, use_deg_lane, cdt, fo_pad):
    if use_deg_lane:
        (src_ref, edge_ref, sid_ref, did_ref, w_ref, bias_ref,
         out_ref, acc_ref) = refs
        deg_ref = None
    else:
        (src_ref, edge_ref, sid_ref, did_ref, w_ref, bias_ref,
         out_ref, acc_ref, deg_ref) = refs

    e_step = pl.program_id(0)

    @pl.when(e_step == 0)
    def _init():
        acc_ref[...] = jnp.zeros_like(acc_ref)
        if deg_ref is not None:
            deg_ref[...] = jnp.zeros_like(deg_ref)

    msg = _edge_messages(src_ref, edge_ref, sid_ref, w_ref, mp_op=mp_op,
                         distributes=distributes, use_deg_lane=use_deg_lane,
                         cdt=cdt, fo_pad=fo_pad)
    _scatter_accumulate(msg, did_ref[...], 0, acc_ref, deg_ref, cdt)

    @pl.when(e_step == pl.num_programs(0) - 1)
    def _fin():
        _finalize(out_ref, acc_ref, deg_ref, bias_ref, fo_pad)


def _message_kernel(src_ref, edge_ref, sid_ref, w_ref, msg_ref, *, mp_op,
                    distributes, use_deg_lane, cdt, fo_pad):
    msg = _edge_messages(src_ref, edge_ref, sid_ref, w_ref, mp_op=mp_op,
                         distributes=distributes, use_deg_lane=use_deg_lane,
                         cdt=cdt, fo_pad=fo_pad)
    msg_ref[...] = msg.astype(msg_ref.dtype)


def _scatter_kernel(*refs, use_deg_lane, cdt, fo_pad):
    if use_deg_lane:
        msg_ref, did_ref, bias_ref, out_ref, acc_ref = refs
        deg_ref = None
    else:
        msg_ref, did_ref, bias_ref, out_ref, acc_ref, deg_ref = refs

    d_step = pl.program_id(0)
    e_step = pl.program_id(1)

    @pl.when(e_step == 0)
    def _init():
        acc_ref[...] = jnp.zeros_like(acc_ref)
        if deg_ref is not None:
            deg_ref[...] = jnp.zeros_like(deg_ref)

    _scatter_accumulate(msg_ref[...], did_ref[...], d_step, acc_ref, deg_ref, cdt)

    @pl.when(e_step == pl.num_programs(1) - 1)
    def _fin():
        _finalize(out_ref, acc_ref, deg_ref, bias_ref, fo_pad)


# ---------------------------------------------------------------------------
# wrapper
# ---------------------------------------------------------------------------
def graph_conv_with_edge_feat(src_feats, edge_feats, src_ids, dst_ids, n_dst,
                              weights, bias, mp_op='concat', *,
                              edge_tile=512, dst_tile=512, use_bf16=False):
    """Forward pass of GraphConvwithEdgeFeat (non-empty-graph path).

    src_feats: [N_src, F]; edge_feats: [E, F]; src_ids/dst_ids: [E] int
    weights: [2F, Fo] for 'concat', else [F, Fo]; bias: [Fo].
    Returns: [n_dst, Fo] float32.
    """
    assert mp_op in ('concat', 'add', 'sub', 'mul', 'div')
    f32 = jnp.float32
    cdt = jnp.bfloat16 if use_bf16 else jnp.float32      # MXU compute dtype
    io_dt = cdt                                          # dtype of streamed operands
    msg_dt = cdt                                         # dtype of [E, Fo] intermediate

    n_src, in_feat = src_feats.shape
    n_edges = edge_feats.shape[0]
    out_feat = weights.shape[1]
    distributes = mp_op in ('concat', 'add', 'sub')

    # ---- padded / tiled sizes (lane-dense features & outputs) ----
    f_pad = _round_up(in_feat, 128)
    use_deg_lane = (out_feat % 128) != 0
    fo_pad = _round_up(out_feat + (1 if use_deg_lane else 0), 128)
    ns_pad = _round_up(n_src, 128)

    te = min(_round_up(edge_tile, 128), _round_up(max(n_edges, 1), 128))
    e_pad = _round_up(max(n_edges, 1), te)
    n_e_tiles = e_pad // te

    dst_tile = max(8, _round_up(dst_tile, 8))
    nd_full = _round_up(n_dst, 8)
    if nd_full <= dst_tile:
        tnd, nd_pad, n_d_tiles = nd_full, nd_full, 1
    else:
        tnd = dst_tile
        nd_pad = _round_up(n_dst, tnd)
        n_d_tiles = nd_pad // tnd

    # ---- weights / pre-projected source features ----
    w_f32 = weights.astype(f32)
    if distributes:
        if mp_op == 'concat':
            w_src, w_edge = w_f32[:in_feat], w_f32[in_feat:]
        elif mp_op == 'add':
            w_src, w_edge = w_f32, w_f32
        else:  # sub
            w_src, w_edge = w_f32, -w_f32
        # project source features once, outside the kernel (plain XLA matmul)
        src_proj = src_feats.astype(f32) @ w_src                  # [N_src, Fo]
        src_arg = _pad2d(src_proj, ns_pad, fo_pad, io_dt)
        src_cols = fo_pad
        w_arg = _pad2d(w_edge, f_pad, fo_pad, io_dt)
    else:
        src_arg = _pad2d(src_feats, ns_pad, f_pad, io_dt)
        src_cols = f_pad
        w_arg = _pad2d(w_f32, f_pad, fo_pad, io_dt)

    # edge features: pad with 1 for 'div' so padded rows/lanes never NaN
    edge_fill = 1.0 if mp_op == 'div' else 0.0
    edge_p = _pad2d(edge_feats, e_pad, f_pad, io_dt, fill=edge_fill)
    bias_p = _pad2d(bias.reshape(1, -1).astype(f32), 1, fo_pad, f32)

    # edge endpoint ids (pad with -1 so padded edges never gather/scatter)
    sid = src_ids.astype(jnp.int32)
    did = dst_ids.astype(jnp.int32)
    if e_pad > n_edges:
        pad = jnp.full((e_pad - n_edges,), -1, jnp.int32)
        sid = jnp.concatenate([sid, pad])
        did = jnp.concatenate([did, pad])
    sid_col = sid.reshape(e_pad, 1)     # edges on sublanes (gather one-hot)
    did_row = did.reshape(1, e_pad)     # lane-dense (scatter one-hot)

    # ---- VMEM budget: pipeline buffers (x2) + scratch + temporaries ----
    need = (2 * (_nbytes((ns_pad, src_cols), io_dt)
                 + _nbytes((te, f_pad), io_dt)
                 + _nbytes((te, fo_pad), msg_dt)
                 + _nbytes((te, 1), jnp.int32)
                 + _nbytes((1, te), jnp.int32)
                 + _nbytes((f_pad, fo_pad), io_dt)
                 + _nbytes((1, fo_pad), f32)
                 + _nbytes((tnd, fo_pad), f32))
            + _nbytes((tnd, fo_pad), f32) + _nbytes((tnd, 1), f32)
            + 4 * te * max(ns_pad, fo_pad, f_pad, tnd) * 4)
    vmem_bytes = int(min(max(2 * need, 32 * 1024 * 1024), 100 * 1024 * 1024))

    common_params = dict(mp_op=mp_op, distributes=distributes,
                         use_deg_lane=use_deg_lane, cdt=cdt, fo_pad=fo_pad)
    scatter_scratch = [pltpu.VMEM((tnd, fo_pad), f32)]
    if not use_deg_lane:
        scatter_scratch.append(pltpu.VMEM((tnd, 1), f32))

    if n_d_tiles == 1:
        # single fused kernel: one pass over edge tiles, resident accumulator
        out = pl.pallas_call(
            functools.partial(_fused_kernel, **common_params),
            grid=(n_e_tiles,),
            in_specs=[
                pl.BlockSpec((ns_pad, src_cols), lambda e: (0, 0)),  # src (resident)
                pl.BlockSpec((te, f_pad), lambda e: (e, 0)),         # edge feats
                pl.BlockSpec((te, 1), lambda e: (e, 0)),             # src ids
                pl.BlockSpec((1, te), lambda e: (0, e)),             # dst ids
                pl.BlockSpec((f_pad, fo_pad), lambda e: (0, 0)),     # W_edge / W
                pl.BlockSpec((1, fo_pad), lambda e: (0, 0)),         # bias
            ],
            out_specs=pl.BlockSpec((tnd, fo_pad), lambda e: (0, 0)),
            out_shape=jax.ShapeDtypeStruct((nd_pad, fo_pad), f32),
            scratch_shapes=scatter_scratch,
            compiler_params=pltpu.CompilerParams(
                dimension_semantics=("arbitrary",),
                vmem_limit_bytes=vmem_bytes),
        )(src_arg, edge_p, sid_col, did_row, w_arg, bias_p)
    else:
        # 1) per-edge messages computed exactly once (never per dst tile)
        msgs = pl.pallas_call(
            functools.partial(_message_kernel, **common_params),
            grid=(n_e_tiles,),
            in_specs=[
                pl.BlockSpec((ns_pad, src_cols), lambda e: (0, 0)),
                pl.BlockSpec((te, f_pad), lambda e: (e, 0)),
                pl.BlockSpec((te, 1), lambda e: (e, 0)),
                pl.BlockSpec((f_pad, fo_pad), lambda e: (0, 0)),
            ],
            out_specs=pl.BlockSpec((te, fo_pad), lambda e: (e, 0)),
            out_shape=jax.ShapeDtypeStruct((e_pad, fo_pad), msg_dt),
            compiler_params=pltpu.CompilerParams(
                dimension_semantics=("parallel",),
                vmem_limit_bytes=vmem_bytes),
        )(src_arg, edge_p, sid_col, w_arg)

        # 2) dense one-hot scatter-sum + degree normalization + bias
        out = pl.pallas_call(
            functools.partial(_scatter_kernel, use_deg_lane=use_deg_lane,
                              cdt=cdt, fo_pad=fo_pad),
            grid=(n_d_tiles, n_e_tiles),
            in_specs=[
                pl.BlockSpec((te, fo_pad), lambda d, e: (e, 0)),     # messages
                pl.BlockSpec((1, te), lambda d, e: (0, e)),          # dst ids
                pl.BlockSpec((1, fo_pad), lambda d, e: (0, 0)),      # bias
            ],
            out_specs=pl.BlockSpec((tnd, fo_pad), lambda d, e: (d, 0)),
            out_shape=jax.ShapeDtypeStruct((nd_pad, fo_pad), f32),
            scratch_shapes=scatter_scratch,
            compiler_params=pltpu.CompilerParams(
                dimension_semantics=("parallel", "arbitrary"),
                vmem_limit_bytes=vmem_bytes),
        )(msgs, did_row, bias_p)

    return out[:n_dst, :out_feat]


# ---------------------------------------------------------------------------
# pure-JAX reference + demo
# ---------------------------------------------------------------------------
def _reference(src_feats, edge_feats, src_ids, dst_ids, n_dst, weights, bias,
               mp_op='concat'):
    src_pe = src_feats[src_ids]
    if mp_op == 'concat':
        m_in = jnp.concatenate([src_pe, edge_feats], axis=1)
    elif mp_op == 'add':
        m_in = src_pe + edge_feats
    elif mp_op == 'sub':
        m_in = src_pe - edge_feats
    elif mp_op == 'mul':
        m_in = src_pe * edge_feats
    else:
        m_in = src_pe / edge_feats
    msg = m_in @ weights
    agg = jnp.zeros((n_dst, weights.shape[1]), jnp.float32).at[dst_ids].add(msg)
    deg = jnp.zeros((n_dst,), jnp.float32).at[dst_ids].add(1.0)
    norm = jnp.where(deg > 0, deg ** -0.5, 0.0)
    return agg * norm[:, None] + bias[None, :]


def _make_case(key, mp_op, n_src, n_dst, n_edges, in_feat, out_feat):
    k_src, k_edge, k_w, k_b, k_sid = jax.random.split(key, 5)
    src_feats = jax.random.normal(k_src, (n_src, in_feat), jnp.float32)
    if mp_op == 'div':
        edge_feats = jax.random.uniform(k_edge, (n_edges, in_feat), jnp.float32,
                                        0.5, 1.5)
    else:
        edge_feats = jax.random.normal(k_edge, (n_edges, in_feat), jnp.float32)
    src_ids = jax.random.randint(k_sid, (n_edges,), 0, n_src, dtype=jnp.int32)
    dst_ids = jnp.arange(n_edges, dtype=jnp.int32) % n_dst
    w_in = in_feat * 2 if mp_op == 'concat' else in_feat
    bound = (6.0 / (w_in + out_feat)) ** 0.5
    weights = jax.random.uniform(k_w, (w_in, out_feat), jnp.float32, -bound, bound)
    bias = 0.1 * jax.random.normal(k_b, (out_feat,), jnp.float32)
    return src_feats, edge_feats, src_ids, dst_ids, weights, bias


if __name__ == "__main__":
    key = jax.random.PRNGKey(0)
    #        mp_op    Ns Nd  E  Fin Fout bf16  dst_tile  tol
    cases = [
        ('concat',     8,  8, 16, 32,  32, False, 512, 1e-3),  # fused, deg lane
        ('div',        8,  8, 16, 32,  32, False, 512, 1e-3),  # fused, mul/div path
        ('concat',     8,  8, 32, 32, 128, False, 512, 1e-3),  # fused, 128-aligned Fo
        ('concat',     8, 16, 32, 32,  32, False,   8, 1e-3),  # split message+scatter
        ('add',        8,  8, 16, 32,  32, True,  512, 1.5e-1),  # bf16 compute knob
    ]
    for i, (mp_op, n_src, n_dst, n_edges, in_feat, out_feat,
            use_bf16, dst_tile, tol) in enumerate(cases):
        case_key = jax.random.fold_in(key, i)
        (src_feats, edge_feats, src_ids, dst_ids,
         weights, bias) = _make_case(case_key, mp_op, n_src, n_dst, n_edges,
                                     in_feat, out_feat)
        h = graph_conv_with_edge_feat(src_feats, edge_feats, src_ids, dst_ids,
                                      n_dst, weights, bias, mp_op=mp_op,
                                      dst_tile=dst_tile, use_bf16=use_bf16)
        h = jax.block_until_ready(h)
        ref = _reference(src_feats, edge_feats, src_ids, dst_ids, n_dst,
                         weights, bias, mp_op=mp_op)
        assert h.shape == (n_dst, out_feat), (mp_op, h.shape)
        assert jnp.allclose(h, ref, atol=tol, rtol=tol), (
            mp_op, float(jnp.max(jnp.abs(h - ref))))
    print("KERNEL_OK")
</pallas_src>

<mosaic_0001>
module attributes {stable_mosaic.version = 11 : i64} {
  func.func @_fused_kernel(%arg0: i32, %arg1: memref<128x128xf32, #tpu.memory_space<vmem>>, %arg2: memref<128x128xf32, #tpu.memory_space<vmem>>, %arg3: memref<128x1xi32, #tpu.memory_space<vmem>>, %arg4: memref<1x128xi32, #tpu.memory_space<vmem>>, %arg5: memref<128x128xf32, #tpu.memory_space<vmem>>, %arg6: memref<1x128xf32, #tpu.memory_space<vmem>>, %arg7: memref<8x128xf32, #tpu.memory_space<vmem>>, %arg8: memref<8x128xf32, #tpu.memory_space<vmem>>) attributes {dimension_semantics = [#tpu.dimension_semantics<arbitrary>], iteration_bounds = array<i64: 1>, scalar_prefetch = 0 : i64, scratch_operands = 1 : i64, tpu.core_type = #tpu.core_type<tc>, window_params = [{pipeline_mode = #tpu.pipeline_mode<synchronous>, transform_indices = @transform_0, window_bounds = array<i64: 128, 128>}, {transform_indices = @transform_1, window_bounds = array<i64: 128, 128>}, {transform_indices = @transform_2, window_bounds = array<i64: 128, 1>}, {transform_indices = @transform_3, window_bounds = array<i64: 1, 128>}, {pipeline_mode = #tpu.pipeline_mode<synchronous>, transform_indices = @transform_4, window_bounds = array<i64: 128, 128>}, {pipeline_mode = #tpu.pipeline_mode<synchronous>, transform_indices = @transform_5, window_bounds = array<i64: 1, 128>}, {pipeline_mode = #tpu.pipeline_mode<synchronous>, transform_indices = @transform_6, window_bounds = array<i64: 8, 128>}]} {
    %c0_i32 = arith.constant 0 : i32
    %0 = arith.cmpi eq, %arg0, %c0_i32 : i32
    %1 = arith.extui %0 : i1 to i32
    %c0_i32_0 = arith.constant 0 : i32
    %2 = arith.cmpi ne, %1, %c0_i32_0 : i32
    scf.if %2 {
      %cst_19 = arith.constant 0.000000e+00 : f32
      %33 = vector.broadcast %cst_19 : f32 to vector<8x128xf32>
      %c0_20 = arith.constant 0 : index
      %c0_21 = arith.constant 0 : index
      %34 = vector.load %arg8[%c0_20, %c0_21] : memref<8x128xf32, #tpu.memory_space<vmem>>, vector<8x128xf32>
      tpu.vector_store %arg8[%c0_20, %c0_21], %33 {strides = array<i32>} : memref<8x128xf32, #tpu.memory_space<vmem>>, vector<8x128xf32>,
    } else {
    }
    %c0 = arith.constant 0 : index
    %c0_1 = arith.constant 0 : index
    %3 = vector.load %arg3[%c0, %c0_1] : memref<128x1xi32, #tpu.memory_space<vmem>>, vector<128x1xi32>
    %4 = tpu.iota {dimensions = array<i32: 1>} : vector<128x128xi32>
    %5 = vector.broadcast %3 : vector<128x1xi32> to vector<128x128xi32>
    %6 = arith.cmpi eq, %5, %4 : vector<128x128xi32>
    %7 = arith.extui %6 : vector<128x128xi1> to vector<128x128xi32>
    %8 = arith.sitofp %7 : vector<128x128xi32> to vector<128x128xf32>
    %c0_2 = arith.constant 0 : index
    %c0_3 = arith.constant 0 : index
    %9 = vector.load %arg1[%c0_2, %c0_3] : memref<128x128xf32, #tpu.memory_space<vmem>>, vector<128x128xf32>
    %cst = arith.constant dense<0.000000e+00> : vector<128x128xf32>
    %10 = tpu.matmul %8, %9, %cst {dimension_numbers = #tpu.dot_dimension_numbers<[1], [0], [0], [1], [0, 0, 1, 1], [], []>} : vector<128x128xf32>, vector<128x128xf32>, vector<128x128xf32> -> vector<128x128xf32>
    %c0_4 = arith.constant 0 : index
    %c0_5 = arith.constant 0 : index
    %11 = vector.load %arg2[%c0_4, %c0_5] : memref<128x128xf32, #tpu.memory_space<vmem>>, vector<128x128xf32>
    %c0_6 = arith.constant 0 : index
    %c0_7 = arith.constant 0 : index
    %12 = vector.load %arg5[%c0_6, %c0_7] : memref<128x128xf32, #tpu.memory_space<vmem>>, vector<128x128xf32>
    %cst_8 = arith.constant dense<0.000000e+00> : vector<128x128xf32>
    %13 = tpu.matmul %11, %12, %cst_8 {dimension_numbers = #tpu.dot_dimension_numbers<[1], [0], [0], [1], [0, 0, 1, 1], [], []>} : vector<128x128xf32>, vector<128x128xf32>, vector<128x128xf32> -> vector<128x128xf32>
    %14 = arith.addf %10, %13 : vector<128x128xf32>
    %15 = tpu.iota {dimensions = array<i32: 1>} : vector<128x128xi32>
    %c127_i32 = arith.constant 127 : i32
    %16 = vector.broadcast %c127_i32 : i32 to vector<128x128xi32>
    %17 = arith.cmpi eq, %15, %16 : vector<128x128xi32>
    %cst_9 = arith.constant 1.000000e+00 : f32
    %18 = vector.broadcast %cst_9 : f32 to vector<128x128xf32>
    %19 = arith.select %17, %18, %14 : vector<128x128xi1>, vector<128x128xf32>
    %c0_10 = arith.constant 0 : index
    %c0_11 = arith.constant 0 : index
    %20 = vector.load %arg4[%c0_10, %c0_11] : memref<1x128xi32, #tpu.memory_space<vmem>>, vector<1x128xi32>
    %21 = tpu.iota {dimensions = array<i32: 0>} : vector<8x128xi32>
    %22 = vector.broadcast %20 : vector<1x128xi32> to vector<8x128xi32>
    %23 = arith.cmpi eq, %22, %21 : vector<8x128xi32>
    %24 = arith.extui %23 : vector<8x128xi1> to vector<8x128xi32>
    %25 = arith.sitofp %24 : vector<8x128xi32> to vector<8x128xf32>
    %c0_12 = arith.constant 0 : index
    %c0_13 = arith.constant 0 : index
    %26 = vector.load %arg8[%c0_12, %c0_13] : memref<8x128xf32, #tpu.memory_space<vmem>>, vector<8x128xf32>
    %cst_14 = arith.constant dense<0.000000e+00> : vector<8x128xf32>
    %27 = tpu.matmul %25, %19, %cst_14 {dimension_numbers = #tpu.dot_dimension_numbers<[1], [0], [0], [1], [0, 0, 1, 1], [], []>} : vector<8x128xf32>, vector<128x128xf32>, vector<8x128xf32> -> vector<8x128xf32>
    %28 = arith.addf %26, %27 : vector<8x128xf32>
    %c0_15 = arith.constant 0 : index
    %c0_16 = arith.constant 0 : index
    %29 = vector.load %arg8[%c0_15, %c0_16] : memref<8x128xf32, #tpu.memory_space<vmem>>, vector<8x128xf32>
    tpu.vector_store %arg8[%c0_15, %c0_16], %28 {strides = array<i32>} : memref<8x128xf32, #tpu.memory_space<vmem>>, vector<8x128xf32>,
    %c0_i32_17 = arith.constant 0 : i32
    %30 = arith.cmpi eq, %arg0, %c0_i32_17 : i32
    %31 = arith.extui %30 : i1 to i32
    %c0_i32_18 = arith.constant 0 : i32
    %32 = arith.cmpi ne, %31, %c0_i32_18 : i32
    scf.if %32 {
      %c0_19 = arith.constant 0 : index
      %c0_20 = arith.constant 0 : index
      %33 = vector.load %arg8[%c0_19, %c0_20] : memref<8x128xf32, #tpu.memory_space<vmem>>, vector<8x128xf32>
      %34 = vector.extract_strided_slice %33 {offsets = [0, 127], sizes = [8, 1], strides = [1, 1]} : vector<8x128xf32> to vector<8x1xf32>
      %cst_21 = arith.constant 0.000000e+00 : f32
      %35 = vector.broadcast %cst_21 : f32 to vector<8x1xf32>
      %36 = arith.cmpf ogt, %34, %35 : vector<8x1xf32>
      %37 = math.rsqrt %34 : vector<8x1xf32>
      %cst_22 = arith.constant 0.000000e+00 : f32
      %38 = vector.broadcast %cst_22 : f32 to vector<8x1xf32>
      %39 = arith.select %36, %37, %38 : vector<8x1xi1>, vector<8x1xf32>
      %40 = vector.broadcast %39 : vector<8x1xf32> to vector<8x128xf32>
      %41 = arith.mulf %33, %40 : vector<8x128xf32>
      %c0_23 = arith.constant 0 : index
      %c0_24 = arith.constant 0 : index
      %42 = vector.load %arg6[%c0_23, %c0_24] : memref<1x128xf32, #tpu.memory_space<vmem>>, vector<1x128xf32>
      %43 = vector.broadcast %42 : vector<1x128xf32> to vector<8x128xf32>
      %44 = arith.addf %41, %43 : vector<8x128xf32>
      %c0_25 = arith.constant 0 : index
      %c0_26 = arith.constant 0 : index
      %45 = vector.load %arg7[%c0_25, %c0_26] : memref<8x128xf32, #tpu.memory_space<vmem>>, vector<8x128xf32>
      tpu.vector_store %arg7[%c0_25, %c0_26], %44 {strides = array<i32>} : memref<8x128xf32, #tpu.memory_space<vmem>>, vector<8x128xf32>,
    } else {
    }
    return
  }
  func.func @transform_0(%arg0: i32) -> (i32, i32) {
    %c0_i32 = arith.constant 0 : i32
    %c0_i32_0 = arith.constant 0 : i32
    %c0_i32_1 = arith.constant 0 : i32
    return %c0_i32, %c0_i32_0 : i32, i32
  }
  func.func @transform_1(%arg0: i32) -> (i32, i32) {
    %c0_i32 = arith.constant 0 : i32
    %c0_i32_0 = arith.constant 0 : i32
    return %arg0, %c0_i32 : i32, i32
  }
  func.func @transform_2(%arg0: i32) -> (i32, i32) {
    %c0_i32 = arith.constant 0 : i32
    %c0_i32_0 = arith.constant 0 : i32
    return %arg0, %c0_i32 : i32, i32
  }
  func.func @transform_3(%arg0: i32) -> (i32, i32) {
    %c0_i32 = arith.constant 0 : i32
    %c0_i32_0 = arith.constant 0 : i32
    return %c0_i32, %arg0 : i32, i32
  }
  func.func @transform_4(%arg0: i32) -> (i32, i32) {
    %c0_i32 = arith.constant 0 : i32
    %c0_i32_0 = arith.constant 0 : i32
    %c0_i32_1 = arith.constant 0 : i32
    return %c0_i32, %c0_i32_0 : i32, i32
  }
  func.func @transform_5(%arg0: i32) -> (i32, i32) {
    %c0_i32 = arith.constant 0 : i32
    %c0_i32_0 = arith.constant 0 : i32
    %c0_i32_1 = arith.constant 0 : i32
    return %c0_i32, %c0_i32_0 : i32, i32
  }
  func.func @transform_6(%arg0: i32) -> (i32, i32) {
    %c0_i32 = arith.constant 0 : i32
    %c0_i32_0 = arith.constant 0 : i32
    %c0_i32_1 = arith.constant 0 : i32
    return %c0_i32, %c0_i32_0 : i32, i32
  }
}

</mosaic_0001>

<llo_original>
// kernel: tpu_custom_call.1
$region0: #{tpu_custom_call.1}
  #allocation0 [shape = 'u32[]', space=smem, size = 0x4, offset = 0x4, fixed_abs, tag = 'smem constant byte address 0x4 - core index']
  #allocation1 [shape = 'u32[72,128]{1,0:T(1,128)}', space=vmem, size = 0x9000, scoped, tag = 'internal scratch']
  #allocation2 [shape = 'f32[8,128]{1,0:T(8,128)}', space=vmem, size = 0x1000, scoped, tag = 'scratch operand']
  %s0 = inlined_call_operand.vmem [shape: f32[128,128], index: 0, kind: input, shape index: {}]
  %s1 = inlined_call_operand.hbm [shape: f32[128,128], index: 1, kind: input, shape index: {}]
  %s2 = inlined_call_operand.vmem [shape: s32[128,1], index: 2, kind: input, shape index: {}]
  %s3 = inlined_call_operand.vmem [shape: s32[1,128], index: 3, kind: input, shape index: {}]
  %s4 = inlined_call_operand.hbm [shape: f32[128,128], index: 4, kind: input, shape index: {}]
  %s5 = inlined_call_operand.vmem [shape: f32[1,128], index: 5, kind: input, shape index: {}]
  %s6 = inlined_call_operand.hbm [shape: f32[8,128], index: 6, kind: output, shape index: {}]
  %s7 = sld [smem:[#allocation0]]
  $region50: #{tpu_custom_call.1} parent=0
    _
  %s9 = ssub.s32 1, %s7
  %s10 = scalar_select 0, %s9, %s7
  $region1: #{tpu_custom_call.1} parent=0
    #allocation3 [shape = 'u8[65536]{0}', space=vmem, size = 0x10000, scoped, tag = 'input window, operand 1, single buffered']
    #allocation4 [shape = 's32[1]{0}', space=sflag, size = 0x4, scoped, tag = 'scoped memory for tpu_custom_call.1']
    #allocation5 [shape = 's32[1]{0}', space=sflag, size = 0x4, scoped, tag = 'scoped memory for tpu_custom_call.1']
    #allocation6 [shape = 'u8[65536]{0}', space=vmem, size = 0x10000, scoped, tag = 'input window, operand 4, single buffered']
    #allocation7 [shape = 's32[1]{0}', space=sflag, size = 0x4, scoped, tag = 'scoped memory for tpu_custom_call.1']
    #allocation8 [shape = 'u8[4096]{0}', space=vmem, size = 0x1000, scoped, tag = 'output window, operand 0, single buffered']
    %11 = vsyncpa [#allocation4], 0
    %12 = vsyncpa [#allocation7], 0
    %13 = vsyncpa [#allocation5], 0
    // Predicated region
    $region2: #{tpu_custom_call.1} parent=1 // pred_check
      _
    $region3: #{tpu_custom_call.1} parent=1 // pred_check_branch
      %15 = sbr.rel (0) target = $region5
    $region4: #{tpu_custom_call.1} parent=1 // pred_region
      _
    $region5: #{tpu_custom_call.1} parent=1 // pred_fallthru
      _
    // Predicated region
    $region6: #{tpu_custom_call.1} parent=1 // pred_check
      _
    $region7: #{tpu_custom_call.1} parent=1 // pred_check_branch
      %17 = sbr.rel (0) target = $region9
    $region8: #{tpu_custom_call.1} parent=1 // pred_region
      %19 = vsyncadd [#allocation4], 0
      %s20 = sshll.u32 %s1, 4
      %s21 = int_to_ptr.hbm [resolvable:$true] %s20
      %s22 = sshll.u32 [#allocation3], 4
      %s23 = int_to_ptr.vmem [resolvable:$true] %s22
      %28 = dma.hbm_to_vmem [thread:$0]  %s21, 2048, %s23, [#allocation4], 128, 128, 8
    $region9: #{tpu_custom_call.1} parent=1 // pred_fallthru
      _
    // Predicated region
    $region10: #{tpu_custom_call.1} parent=1 // pred_check
      _
    $region11: #{tpu_custom_call.1} parent=1 // pred_check_branch
      %30 = sbr.rel (0) target = $region13
    $region12: #{tpu_custom_call.1} parent=1 // pred_region
      _
    $region13: #{tpu_custom_call.1} parent=1 // pred_fallthru
      _
    // Predicated region
    $region14: #{tpu_custom_call.1} parent=1 // pred_check
      _
    $region15: #{tpu_custom_call.1} parent=1 // pred_check_branch
      %32 = sbr.rel (0) target = $region17
    $region16: #{tpu_custom_call.1} parent=1 // pred_region
      _
    $region17: #{tpu_custom_call.1} parent=1 // pred_fallthru
      _
    // Predicated region
    $region18: #{tpu_custom_call.1} parent=1 // pred_check
      _
    $region19: #{tpu_custom_call.1} parent=1 // pred_check_branch
      %34 = sbr.rel (0) target = $region21
    $region20: #{tpu_custom_call.1} parent=1 // pred_region
      %36 = vsyncadd [#allocation7], 0
      %s37 = sshll.u32 %s4, 4
      %s38 = int_to_ptr.hbm [resolvable:$true] %s37
      %s39 = sshll.u32 [#allocation6], 4
      %s40 = int_to_ptr.vmem [resolvable:$true] %s39
      %45 = dma.hbm_to_vmem [thread:$0]  %s38, 2048, %s40, [#allocation7], 128, 128, 8
    $region21: #{tpu_custom_call.1} parent=1 // pred_fallthru
      _
    // Predicated region
    $region22: #{tpu_custom_call.1} parent=1 // pred_check
      _
    $region23: #{tpu_custom_call.1} parent=1 // pred_check_branch
      %47 = sbr.rel (0) target = $region25
    $region24: #{tpu_custom_call.1} parent=1 // pred_region
      _
    $region25: #{tpu_custom_call.1} parent=1 // pred_fallthru
      _
    // Predicated region
    $region26: #{tpu_custom_call.1} parent=1 // pred_check
      _
    $region27: #{tpu_custom_call.1} parent=1 // pred_check_branch
      %49 = sbr.rel (0) target = $region29
    $region28: #{tpu_custom_call.1} parent=1 // pred_region
      %51 = dma.done [#allocation4], 2048
    $region29: #{tpu_custom_call.1} parent=1 // pred_fallthru
      _
    // Predicated region
    $region30: #{tpu_custom_call.1} parent=1 // pred_check
      _
    $region31: #{tpu_custom_call.1} parent=1 // pred_check_branch
      %53 = sbr.rel (0) target = $region33
    $region32: #{tpu_custom_call.1} parent=1 // pred_region
      %55 = dma.done [#allocation7], 2048
    $region33: #{tpu_custom_call.1} parent=1 // pred_fallthru
      _
    %p56 = scmp.eq.s32.totalorder 0, 0
    // Predicated region
    $region34: #{tpu_custom_call.1} parent=1 // pred_check
      %p57 = pneg %p56
    $region35: #{tpu_custom_call.1} parent=1 // pred_check_branch
      %59 = sbr.rel (%p57) target = $region37
    $region36: #{tpu_custom_call.1} parent=1 // pred_region
      %60 = vst [vmem:[#allocation2] sm:$0xff] 0.0
    $region37: #{tpu_custom_call.1} parent=1 // pred_fallthru
      _
    %v61 = vld [vmem:[%s2] sm:$0xff]
    %v62 = vld [vmem:[%s2 + $0x8] sm:$0xff]
    %v63 = vld [vmem:[%s2 + $0x10] sm:$0xff]
    %v64 = vld [vmem:[%s2 + $0x18] sm:$0xff]
    %v65 = vld [vmem:[%s2 + $0x20] sm:$0xff]
    %v66 = vld [vmem:[%s2 + $0x28] sm:$0xff]
    %v67 = vld [vmem:[%s2 + $0x30] sm:$0xff]
    %v68 = vld [vmem:[%s2 + $0x38] sm:$0xff]
    %v69 = vld [vmem:[%s2 + $0x40] sm:$0xff]
    %v70 = vld [vmem:[%s2 + $0x48] sm:$0xff]
    %v71 = vld [vmem:[%s2 + $0x50] sm:$0xff]
    %v72 = vld [vmem:[%s2 + $0x58] sm:$0xff]
    %v73 = vld [vmem:[%s2 + $0x60] sm:$0xff]
    %v74 = vld [vmem:[%s2 + $0x68] sm:$0xff]
    %v75 = vld [vmem:[%s2 + $0x70] sm:$0xff]
    %v76 = vld [vmem:[%s2 + $0x78] sm:$0xff]
    %v77 = vlaneseq
    %v78 = vand.u32 %v77, 127
    %79 = vset.pattern.permute.xlu0 0
    %80 = vperm.xlu0 %79, %v61
    %v81 = vpop.permute.xlu0 %80
    %82 = vset.pattern.permute.xlu0 0
    %83 = vperm.xlu0 %82, %v62
    %v84 = vpop.permute.xlu0 %83
    %85 = vset.pattern.permute.xlu0 0
    %86 = vperm.xlu0 %85, %v63
    %v87 = vpop.permute.xlu0 %86
    %88 = vset.pattern.permute.xlu0 0
    %89 = vperm.xlu0 %88, %v64
    %v90 = vpop.permute.xlu0 %89
    %91 = vset.pattern.permute.xlu0 0
    %92 = vperm.xlu0 %91, %v65
    %v93 = vpop.permute.xlu0 %92
    %94 = vset.pattern.permute.xlu0 0
    %95 = vperm.xlu0 %94, %v66
    %v96 = vpop.permute.xlu0 %95
    %97 = vset.pattern.permute.xlu0 0
    %98 = vperm.xlu0 %97, %v67
    %v99 = vpop.permute.xlu0 %98
    %100 = vset.pattern.permute.xlu0 0
    %101 = vperm.xlu0 %100, %v68
    %v102 = vpop.permute.xlu0 %101
    %103 = vset.pattern.permute.xlu0 0
    %104 = vperm.xlu0 %103, %v69
    %v105 = vpop.permute.xlu0 %104
    %106 = vset.pattern.permute.xlu0 0
    %107 = vperm.xlu0 %106, %v70
    %v108 = vpop.permute.xlu0 %107
    %109 = vset.pattern.permute.xlu0 0
    %110 = vperm.xlu0 %109, %v71
    %v111 = vpop.permute.xlu0 %110
    %112 = vset.pattern.permute.xlu0 0
    %113 = vperm.xlu0 %112, %v72
    %v114 = vpop.permute.xlu0 %113
    %115 = vset.pattern.permute.xlu0 0
    %116 = vperm.xlu0 %115, %v73
    %v117 = vpop.permute.xlu0 %116
    %118 = vset.pattern.permute.xlu0 0
    %119 = vperm.xlu0 %118, %v74
    %v120 = vpop.permute.xlu0 %119
    %121 = vset.pattern.permute.xlu0 0
    %122 = vperm.xlu0 %121, %v75
    %v123 = vpop.permute.xlu0 %122
    %124 = vset.pattern.permute.xlu0 0
    %125 = vperm.xlu0 %124, %v76
    %v126 = vpop.permute.xlu0 %125
    %vm127 = vcmp.eq.s32.totalorder %v81, %v78
    %vm128 = vcmp.eq.s32.totalorder %v84, %v78
    %vm129 = vcmp.eq.s32.totalorder %v87, %v78
    %vm130 = vcmp.eq.s32.totalorder %v90, %v78
    %vm131 = vcmp.eq.s32.totalorder %v93, %v78
    %vm132 = vcmp.eq.s32.totalorder %v96, %v78
    %vm133 = vcmp.eq.s32.totalorder %v99, %v78
    %vm134 = vcmp.eq.s32.totalorder %v102, %v78
    %vm135 = vcmp.eq.s32.totalorder %v105, %v78
    %vm136 = vcmp.eq.s32.totalorder %v108, %v78
    %vm137 = vcmp.eq.s32.totalorder %v111, %v78
    %vm138 = vcmp.eq.s32.totalorder %v114, %v78
    %vm139 = vcmp.eq.s32.totalorder %v117, %v78
    %vm140 = vcmp.eq.s32.totalorder %v120, %v78
    %vm141 = vcmp.eq.s32.totalorder %v123, %v78
    %vm142 = vcmp.eq.s32.totalorder %v126, %v78
    %v143 = vsel %vm127, 1, 0
    %v144 = vsel %vm128, 1, 0
    %v145 = vsel %vm129, 1, 0
    %v146 = vsel %vm130, 1, 0
    %v147 = vsel %vm131, 1, 0
    %v148 = vsel %vm132, 1, 0
    %v149 = vsel %vm133, 1, 0
    %v150 = vsel %vm134, 1, 0
    %v151 = vsel %vm135, 1, 0
    %v152 = vsel %vm136, 1, 0
    %v153 = vsel %vm137, 1, 0
    %v154 = vsel %vm138, 1, 0
    %v155 = vsel %vm139, 1, 0
    %v156 = vsel %vm140, 1, 0
    %v157 = vsel %vm141, 1, 0
    %v158 = vsel %vm142, 1, 0
    %v159 = vcvt.s32.f32 %v143
    %v160 = vcvt.s32.f32 %v144
    %v161 = vcvt.s32.f32 %v145
    %v162 = vcvt.s32.f32 %v146
    %v163 = vcvt.s32.f32 %v147
    %v164 = vcvt.s32.f32 %v148
    %v165 = vcvt.s32.f32 %v149
    %v166 = vcvt.s32.f32 %v150
    %v167 = vcvt.s32.f32 %v151
    %v168 = vcvt.s32.f32 %v152
    %v169 = vcvt.s32.f32 %v153
    %v170 = vcvt.s32.f32 %v154
    %v171 = vcvt.s32.f32 %v155
    %v172 = vcvt.s32.f32 %v156
    %v173 = vcvt.s32.f32 %v157
    %v174 = vcvt.s32.f32 %v158
    %v175 = vld [vmem:[%s0] sm:$0xff]
    %v176 = vld [vmem:[%s0 + $0x8] sm:$0xff]
    %v177 = vld [vmem:[%s0 + $0x10] sm:$0xff]
    %v178 = vld [vmem:[%s0 + $0x18] sm:$0xff]
    %v179 = vld [vmem:[%s0 + $0x20] sm:$0xff]
    %v180 = vld [vmem:[%s0 + $0x28] sm:$0xff]
    %v181 = vld [vmem:[%s0 + $0x30] sm:$0xff]
    %v182 = vld [vmem:[%s0 + $0x38] sm:$0xff]
    %v183 = vld [vmem:[%s0 + $0x40] sm:$0xff]
    %v184 = vld [vmem:[%s0 + $0x48] sm:$0xff]
    %v185 = vld [vmem:[%s0 + $0x50] sm:$0xff]
    %v186 = vld [vmem:[%s0 + $0x58] sm:$0xff]
    %v187 = vld [vmem:[%s0 + $0x60] sm:$0xff]
    %v188 = vld [vmem:[%s0 + $0x68] sm:$0xff]
    %v189 = vld [vmem:[%s0 + $0x70] sm:$0xff]
    %v190 = vld [vmem:[%s0 + $0x78] sm:$0xff]
    %v191 = vld [vmem:[#allocation3] sm:$0xff]
    %v192 = vld [vmem:[#allocation3 + $0x8] sm:$0xff]
    %v193 = vld [vmem:[#allocation3 + $0x10] sm:$0xff]
    %v194 = vld [vmem:[#allocation3 + $0x18] sm:$0xff]
    %v195 = vld [vmem:[#allocation3 + $0x20] sm:$0xff]
    %v196 = vld [vmem:[#allocation3 + $0x28] sm:$0xff]
    %v197 = vld [vmem:[#allocation3 + $0x30] sm:$0xff]
    %v198 = vld [vmem:[#allocation3 + $0x38] sm:$0xff]
    %v199 = vld [vmem:[#allocation3 + $0x40] sm:$0xff]
    %v200 = vld [vmem:[#allocation3 + $0x48] sm:$0xff]
    %v201 = vld [vmem:[#allocation3 + $0x50] sm:$0xff]
    %v202 = vld [vmem:[#allocation3 + $0x58] sm:$0xff]
    %v203 = vld [vmem:[#allocation3 + $0x60] sm:$0xff]
    %v204 = vld [vmem:[#allocation3 + $0x68] sm:$0xff]
    %v205 = vld [vmem:[#allocation3 + $0x70] sm:$0xff]
    %v206 = vld [vmem:[#allocation3 + $0x78] sm:$0xff]
    %v207 = vld [vmem:[#allocation6] sm:$0xff]
    %v208 = vld [vmem:[#allocation6 + $0x8] sm:$0xff]
    %v209 = vld [vmem:[#allocation6 + $0x10] sm:$0xff]
    %v210 = vld [vmem:[#allocation6 + $0x18] sm:$0xff]
    %v211 = vld [vmem:[#allocation6 + $0x20] sm:$0xff]
    %v212 = vld [vmem:[#allocation6 + $0x28] sm:$0xff]
    %v213 = vld [vmem:[#allocation6 + $0x30] sm:$0xff]
    %v214 = vld [vmem:[#allocation6 + $0x38] sm:$0xff]
    %v215 = vld [vmem:[#allocation6 + $0x40] sm:$0xff]
    %v216 = vld [vmem:[#allocation6 + $0x48] sm:$0xff]
    %v217 = vld [vmem:[#allocation6 + $0x50] sm:$0xff]
    %v218 = vld [vmem:[#allocation6 + $0x58] sm:$0xff]
    %v219 = vld [vmem:[#allocation6 + $0x60] sm:$0xff]
    %v220 = vld [vmem:[#allocation6 + $0x68] sm:$0xff]
    %v221 = vld [vmem:[#allocation6 + $0x70] sm:$0xff]
    %v222 = vld [vmem:[#allocation6 + $0x78] sm:$0xff]
    %223 = vmatpush.msra.mxu0 %v222
    %224 = vmatpush.msra.mxu0 %v221
    %225 = vmatpush.msra.mxu0 %v220
    %226 = vmatpush.msra.mxu0 %v219
    %227 = vmatpush.msra.mxu0 %v218
    %228 = vmatpush.msra.mxu0 %v217
    %229 = vmatpush.msra.mxu0 %v216
    %230 = vmatpush.msra.mxu0 %v215
    %231 = vmatpush.msra.mxu0 %v214
    %232 = vmatpush.msra.mxu0 %v213
    %233 = vmatpush.msra.mxu0 %v212
    %234 = vmatpush.msra.mxu0 %v211
    %235 = vmatpush.msra.mxu0 %v210
    %236 = vmatpush.msra.mxu0 %v209
    %237 = vmatpush.msra.mxu0 %v208
    %238 = vmatpush.msra.mxu0 %v207
    %239 = vmatmul.f32.gmra.mxu0 %v191
    %v240 = vpop.f32.mrf.mxu0
    %v241 = vadd.f32 0.0, %v240
    %242 = vmatmul.f32.gmra.mxu0 %v192
    %v243 = vpop.f32.mrf.mxu0
    %v244 = vadd.f32 0.0, %v243
    %245 = vmatmul.f32.gmra.mxu0 %v193
    %v246 = vpop.f32.mrf.mxu0
    %v247 = vadd.f32 0.0, %v246
    %248 = vmatmul.f32.gmra.mxu0 %v194
    %v249 = vpop.f32.mrf.mxu0
    %v250 = vadd.f32 0.0, %v249
    %251 = vmatmul.f32.gmra.mxu0 %v195
    %v252 = vpop.f32.mrf.mxu0
    %v253 = vadd.f32 0.0, %v252
    %254 = vmatmul.f32.gmra.mxu0 %v196
    %v255 = vpop.f32.mrf.mxu0
    %v256 = vadd.f32 0.0, %v255
    %257 = vmatmul.f32.gmra.mxu0 %v197
    %v258 = vpop.f32.mrf.mxu0
    %v259 = vadd.f32 0.0, %v258
    %260 = vmatmul.f32.gmra.mxu0 %v198
    %v261 = vpop.f32.mrf.mxu0
    %v262 = vadd.f32 0.0, %v261
    %263 = vmatmul.f32.gmra.mxu0 %v199
    %v264 = vpop.f32.mrf.mxu0
    %v265 = vadd.f32 0.0, %v264
    %266 = vmatmul.f32.gmra.mxu0 %v200
    %v267 = vpop.f32.mrf.mxu0
    %v268 = vadd.f32 0.0, %v267
    %269 = vmatmul.f32.gmra.mxu0 %v201
    %v270 = vpop.f32.mrf.mxu0
    %v271 = vadd.f32 0.0, %v270
    %272 = vmatmul.f32.gmra.mxu0 %v202
    %v273 = vpop.f32.mrf.mxu0
    %v274 = vadd.f32 0.0, %v273
    %275 = vmatmul.f32.gmra.mxu0 %v203
    %v276 = vpop.f32.mrf.mxu0
    %v277 = vadd.f32 0.0, %v276
    %278 = vmatmul.f32.gmra.mxu0 %v204
    %v279 = vpop.f32.mrf.mxu0
    %v280 = vadd.f32 0.0, %v279
    %281 = vmatmul.f32.gmra.mxu0 %v205
    %v282 = vpop.f32.mrf.mxu0
    %v283 = vadd.f32 0.0, %v282
    %284 = vmatmul.f32.gmra.mxu0 %v206
    %v285 = vpop.f32.mrf.mxu0
    %v286 = vadd.f32 0.0, %v285
    %287 = vdwg.mxu0
    %288 = vmatpush.msra.mxu0 %v190
    %289 = vmatpush.msra.mxu0 %v189
    %290 = vmatpush.msra.mxu0 %v188
    %291 = vmatpush.msra.mxu0 %v187
    %292 = vmatpush.msra.mxu0 %v186
    %293 = vmatpush.msra.mxu0 %v185
    %294 = vmatpush.msra.mxu0 %v184
    %295 = vmatpush.msra.mxu0 %v183
    %296 = vmatpush.msra.mxu0 %v182
    %297 = vmatpush.msra.mxu0 %v181
    %298 = vmatpush.msra.mxu0 %v180
    %299 = vmatpush.msra.mxu0 %v179
    %300 = vmatpush.msra.mxu0 %v178
    %301 = vmatpush.msra.mxu0 %v177
    %302 = vmatpush.msra.mxu0 %v176
    %303 = vmatpush.msra.mxu0 %v175
    %304 = vmatmul.f32.gmra.mxu0 %v159
    %v305 = vpop.f32.mrf.mxu0
    %v306 = vadd.f32 %v241, %v305
    %307 = vmatmul.f32.gmra.mxu0 %v160
    %v308 = vpop.f32.mrf.mxu0
    %v309 = vadd.f32 %v244, %v308
    %310 = vmatmul.f32.gmra.mxu0 %v161
    %v311 = vpop.f32.mrf.mxu0
    %v312 = vadd.f32 %v247, %v311
    %313 = vmatmul.f32.gmra.mxu0 %v162
    %v314 = vpop.f32.mrf.mxu0
    %v315 = vadd.f32 %v250, %v314
    %316 = vmatmul.f32.gmra.mxu0 %v163
    %v317 = vpop.f32.mrf.mxu0
    %v318 = vadd.f32 %v253, %v317
    %319 = vmatmul.f32.gmra.mxu0 %v164
    %v320 = vpop.f32.mrf.mxu0
    %v321 = vadd.f32 %v256, %v320
    %322 = vmatmul.f32.gmra.mxu0 %v165
    %v323 = vpop.f32.mrf.mxu0
    %v324 = vadd.f32 %v259, %v323
    %325 = vmatmul.f32.gmra.mxu0 %v166
    %v326 = vpop.f32.mrf.mxu0
    %v327 = vadd.f32 %v262, %v326
    %328 = vmatmul.f32.gmra.mxu0 %v167
    %v329 = vpop.f32.mrf.mxu0
    %v330 = vadd.f32 %v265, %v329
    %331 = vmatmul.f32.gmra.mxu0 %v168
    %v332 = vpop.f32.mrf.mxu0
    %v333 = vadd.f32 %v268, %v332
    %334 = vmatmul.f32.gmra.mxu0 %v169
    %v335 = vpop.f32.mrf.mxu0
    %v336 = vadd.f32 %v271, %v335
    %337 = vmatmul.f32.gmra.mxu0 %v170
    %v338 = vpop.f32.mrf.mxu0
    %v339 = vadd.f32 %v274, %v338
    %340 = vmatmul.f32.gmra.mxu0 %v171
    %v341 = vpop.f32.mrf.mxu0
    %v342 = vadd.f32 %v277, %v341
    %343 = vmatmul.f32.gmra.mxu0 %v172
    %v344 = vpop.f32.mrf.mxu0
    %v345 = vadd.f32 %v280, %v344
    %346 = vmatmul.f32.gmra.mxu0 %v173
    %v347 = vpop.f32.mrf.mxu0
    %v348 = vadd.f32 %v283, %v347
    %349 = vmatmul.f32.gmra.mxu0 %v174
    %v350 = vpop.f32.mrf.mxu0
    %v351 = vadd.f32 %v286, %v350
    %352 = vdwg.mxu0
    %vm353 = vcmp.eq.s32.totalorder %v78, 127
    %v354 = vsel %vm353, 1.0, %v306
    %v355 = vsel %vm353, 1.0, %v309
    %v356 = vsel %vm353, 1.0, %v312
    %v357 = vsel %vm353, 1.0, %v315
    %v358 = vsel %vm353, 1.0, %v318
    %v359 = vsel %vm353, 1.0, %v321
    %v360 = vsel %vm353, 1.0, %v324
    %v361 = vsel %vm353, 1.0, %v327
    %v362 = vsel %vm353, 1.0, %v330
    %v363 = vsel %vm353, 1.0, %v333
    %v364 = vsel %vm353, 1.0, %v336
    %v365 = vsel %vm353, 1.0, %v339
    %v366 = vsel %vm353, 1.0, %v342
    %v367 = vsel %vm353, 1.0, %v345
    %v368 = vsel %vm353, 1.0, %v348
    %v369 = vsel %vm353, 1.0, %v351
    %v370 = vld [vmem:[%s3] sm:$0x1]
    %v371 = vlaneseq
    %v372 = vshrl.u32 %v371, 7
    %v373 = vperm.slane %v370, 0
    %vm374 = vcmp.eq.s32.totalorder %v373, %v372
    %v375 = vsel %vm374, 1, 0
    %v376 = vcvt.s32.f32 %v375
    %v377 = vld [vmem:[#allocation2] sm:$0xff]
    %378 = vmatpush.msra.mxu0 %v369
    %379 = vmatpush.msra.mxu0 %v368
    %380 = vmatpush.msra.mxu0 %v367
    %381 = vmatpush.msra.mxu0 %v366
    %382 = vmatpush.msra.mxu0 %v365
    %383 = vmatpush.msra.mxu0 %v364
    %384 = vmatpush.msra.mxu0 %v363
    %385 = vmatpush.msra.mxu0 %v362
    %386 = vmatpush.msra.mxu0 %v361
    %387 = vmatpush.msra.mxu0 %v360
    %388 = vmatpush.msra.mxu0 %v359
    %389 = vmatpush.msra.mxu0 %v358
    %390 = vmatpush.msra.mxu0 %v357
    %391 = vmatpush.msra.mxu0 %v356
    %392 = vmatpush.msra.mxu0 %v355
    %393 = vmatpush.msra.mxu0 %v354
    %394 = vmatmul.f32.gmra.mxu0 %v376
    %v395 = vpop.f32.mrf.mxu0
    %v396 = vadd.f32 0.0, %v395
    %397 = vdwg.mxu0
    %v398 = vadd.f32 %v377, %v396
    %399 = vst [vmem:[#allocation2] sm:$0xff] %v398
    // Predicated region
    $region38: #{tpu_custom_call.1} parent=1 // pred_check
      %p400 = pneg %p56
    $region39: #{tpu_custom_call.1} parent=1 // pred_check_branch
      %402 = sbr.rel (%p400) target = $region41
    $region40: #{tpu_custom_call.1} parent=1 // pred_region
      %v403 = vld [vmem:[#allocation2] sm:$0xff]
      %vm404 = vcmp.gt.f32.partialorder %v403, 0.0
      %v405 = vrsqrt.pop %v403
      %v406 = vmul.f32 %v405, %v403
      %v407 = vmul.f32 %v406, %v405
      %v408 = vmul.f32 0.5, %v407
      %v409 = vsub.f32 1.5, %v408
      %v410 = vmul.f32 %v405, %v409
      %vm411 = vweird.f32 %v403
      %vm412 = vweird.f32 %v405
      %vm413 = vmor %vm411, %vm412
      %v414 = vsel %vm413, %v405, %v410
      %v415 = vsel %vm404, %v414, 0.0
      %417 = vset.pattern.permute.xlu0 127
      %418 = vperm.xlu0 %417, %v415
      %v419 = vpop.permute.xlu0 %418
      %v421 = vmul.f32 %v403, %v419
      %v422 = vld [vmem:[%s5] sm:$0x1]
      %v424 = vperm.slane %v422, 0
      %v426 = vadd.f32 %v421, %v424
      %427 = vst [vmem:[#allocation8] sm:$0xff] %v426
    $region41: #{tpu_custom_call.1} parent=1 // pred_fallthru
      _
    // Predicated region
    $region42: #{tpu_custom_call.1} parent=1 // pred_check
      _
    $region43: #{tpu_custom_call.1} parent=1 // pred_check_branch
      %429 = sbr.rel (0) target = $region45
    $region44: #{tpu_custom_call.1} parent=1 // pred_region
      %431 = vsyncadd [#allocation5], 0
      %s433 = sshll.u32 [#allocation8], 4
      %s434 = int_to_ptr.vmem [resolvable:$true] %s433
      %s435 = sshll.u32 %s6, 4
      %s436 = int_to_ptr.hbm [resolvable:$true] %s435
      %438 = dma.vmem_to_hbm [thread:$0]  %s434, 128, %s436, [#allocation5]
    $region45: #{tpu_custom_call.1} parent=1 // pred_fallthru
      _
    // Predicated region
    $region46: #{tpu_custom_call.1} parent=1 // pred_check
      _
    $region47: #{tpu_custom_call.1} parent=1 // pred_check_branch
      %440 = sbr.rel (0) target = $region49
    $region48: #{tpu_custom_call.1} parent=1 // pred_region
      %442 = dma.done [#allocation5], 128
    $region49: #{tpu_custom_call.1} parent=1 // pred_fallthru
      _
    %443 = vsyncpa [#allocation4], 1
    %444 = vsyncpa [#allocation7], 1
    %445 = vsyncpa [#allocation5], 1

</llo_original>
